<compile_context>
chip_gen: v7x
topology: tpu7x:2x2x1
jax: 0.10.0
libtpu: 0.0.40
codegen_flags: <defaults>
</compile_context>

<pallas_src>
import math
from functools import partial

import numpy as np
import jax
import jax.numpy as jnp
from jax.experimental import pallas as pl
from jax.experimental.pallas import tpu as pltpu
from jax.scipy.special import erf, logsumexp

# ------------------------- config (small synthetic shapes) -------------------
B = 2            # batch
N_NODES = 8      # nodes per graph
N_DIMS = 3       # spatial coords
IN_NODE_NF = 5   # node feature (one-hot) size
D_FEAT = N_DIMS + IN_NODE_NF          # real xh feature width (8)
D_PACK = D_FEAT + 2                   # + node_mask lane + fragment_mask lane (10)
LANE_NMASK = D_FEAT                   # lane carrying node_mask in packed xh
LANE_FMASK = D_FEAT + 1               # lane carrying fragment_mask
HIDDEN = 32                           # logical hidden size of synthetic MLP
HID_PAD = 128                         # hidden padded to a full vreg lane width
T_STEPS = 1000
NORM_VALUES = (1.0, 1.0, 1.0)
NORM_BIASES = (None, 0.0, 0.0)

SCALAR_LANES = 128  # lane-dense packed per-batch scalar output width
# packed per-batch scalar OUTPUT column indices
COL_ERR_T, COL_NLINK, COL_NOISE_SQ, COL_KL, COL_ERR_X = 0, 1, 2, 3, 4
COL_LOSS_T, COL_L2, COL_NEG_LOG_CONST, COL_DLOGPX = 5, 6, 7, 8

# SMEM per-batch scalar INPUT columns (precomputed in the XLA wrapper)
SC_ALPHA_T, SC_SIGMA_T, SC_ALPHA_T2_PRIOR, SC_KL_COEF = 0, 1, 2, 3
SC_W_LOSS_T, SC_C0 = 4, 5
N_SMEM_COLS = 8


# ---------------- PredefinedNoiseSchedule('polynomial_2') table --------------
def _clip_noise_schedule(alphas2, clip_value=0.001):
    alphas2 = np.concatenate([np.ones(1), alphas2], axis=0)
    alphas_step = alphas2[1:] / alphas2[:-1]
    alphas_step = np.clip(alphas_step, a_min=clip_value, a_max=1.0)
    return np.cumprod(alphas_step, axis=0)


def _polynomial_schedule(timesteps, s=1e-4, power=2.0):
    steps = timesteps + 1
    x = np.linspace(0, steps, steps)
    alphas2 = (1.0 - np.power(x / steps, power)) ** 2
    alphas2 = _clip_noise_schedule(alphas2, clip_value=0.001)
    precision = 1.0 - 2.0 * s
    return precision * alphas2 + s


def make_gamma_table(timesteps=T_STEPS, precision=1e-4):
    alphas2 = _polynomial_schedule(timesteps, s=precision, power=2.0)
    sigmas2 = 1.0 - alphas2
    gamma = -(np.log(alphas2) - np.log(sigmas2))
    return jnp.asarray(gamma, dtype=jnp.float32)


def gamma_lookup(table, t):
    # PredefinedNoiseSchedule.forward: gamma[round(t * T)]
    idx = jnp.round(t * T_STEPS).astype(jnp.int32)
    # torch allows negative indices (t = -1/T when t_int == 0) -> wrap like torch
    idx = jnp.where(idx < 0, idx + (T_STEPS + 1), idx)
    return table[idx[:, 0]].reshape(-1, 1)


# ------------------------------- Pallas kernel --------------------------------
def edm_kernel(scal_ref, xh_ref, eps_ref, w1_ref, w2_ref, bias_ref,
               z_out_ref, sc_out_ref, *, n_dims, d_feat, n_feat_h, n_nodes, norm0):
    b = pl.program_id(0)

    # ---- per-batch scalars from SMEM (precomputed in the XLA wrapper) -------
    alpha_t = scal_ref[b, SC_ALPHA_T]
    sigma_t = scal_ref[b, SC_SIGMA_T]
    alpha_T2 = scal_ref[b, SC_ALPHA_T2_PRIOR]
    kl_coef = scal_ref[b, SC_KL_COEF]     # -log(sigma_T) + 0.5*sigma_T^2 - 0.5
    w_loss_t = scal_ref[b, SC_W_LOSS_T]   # 0.5 * T * (SNR(g_s - g_t) - 1)
    c0 = scal_ref[b, SC_C0]               # 0.5*gamma_0 + 0.5*log(2*pi)

    xh = xh_ref[0]            # (N, D_PACK) f32; masks folded into last 2 lanes
    eps_raw = eps_ref[0]      # (N, D_PACK) f32; zero in mask lanes

    nmask = xh[:, LANE_NMASK:LANE_NMASK + 1]      # (N, 1) node_mask
    fmask = xh[:, LANE_FMASK:LANE_FMASK + 1]      # (N, 1) fragment_mask
    lmask = nmask - fmask                         # linker_mask derived in-kernel
    eps = eps_raw * lmask                         # sample_gaussian_with_mask

    # z_t = alpha_t * xh + sigma_t * eps ; keep fragment part clean
    z_t = alpha_t * xh + sigma_t * eps
    z_t = xh * fmask + z_t * lmask
    z_out_ref[0] = z_t        # mask lanes carry junk; wrapper slices [:d_feat]

    # ---------------- synthetic Dynamics: per-node MLP on the MXU ------------
    # Plain 2-D matmuls with shared bf16 weights; zero w1 rows kill the mask
    # lanes, zero w2 columns keep eps_hat zero outside the real features.
    bvals = bias_ref[0]                               # (2, HID_PAD)
    bias1 = bvals[0:1, :]                             # (1, HID_PAD) = t*w1t + b1
    b2v = bvals[1:2, 0:D_PACK]                        # (1, D_PACK)

    h1 = jnp.dot(z_t.astype(jnp.bfloat16), w1_ref[...],
                 preferred_element_type=jnp.float32)  # (N, HID_PAD)
    h1 = h1 + bias1
    h1 = h1 * jax.nn.sigmoid(h1)                      # SiLU (f32 on all gens)
    out = jnp.dot(h1.astype(jnp.bfloat16), w2_ref[...],
                  preferred_element_type=jnp.float32) # (N, D_PACK)
    eps_hat = (out + b2v) * lmask                     # lmask only (nmask redundant)

    # ---------------- per-batch reductions ((1,1)-shaped) --------------------
    def rsum(v):
        return jnp.sum(v, axis=(0, 1), keepdims=True)

    lane_d = jax.lax.broadcasted_iota(jnp.int32, (1, D_PACK), 1)
    xsel = (lane_d < n_dims).astype(jnp.float32)      # coordinate lanes
    featsel = (lane_d < d_feat).astype(jnp.float32)   # real feature lanes

    diff = eps - eps_hat
    diff_sq = diff * diff
    err_t = rsum(diff_sq)
    err_x = rsum(diff_sq * xsel)
    n_link = rsum(lmask)
    noise_sq = rsum(eps_hat * eps_hat)                # sqrt taken in wrapper

    # KL prior vs N(0,1):
    #   kl = (d_x + N*nf) * (-log sigma_T + 0.5 sigma_T^2 - 0.5) + 0.5*||mu_T||^2
    # (N*nf is torch-faithful; for padded graphs the reference also counts
    #  padded nodes in the constant term.)
    xh_sq = rsum(xh * xh * featsel)
    d_x = n_link * float(n_dims)
    kl = kl_coef * (d_x + float(n_nodes * n_feat_h)) + 0.5 * alpha_T2 * xh_sq

    loss_t_b = w_loss_t * err_t
    l2_b = err_t / (float(d_feat) * jnp.maximum(n_link, 1.0))   # /0 guard
    neg_log_const_b = c0 * d_x
    dlogpx_b = (-math.log(norm0)) * d_x

    # ---------------- single lane-dense packed per-batch scalar store --------
    lane = jax.lax.broadcasted_iota(jnp.int32, (1, SCALAR_LANES), 1)

    def put(col, val):
        return jnp.where(lane == col, val, 0.0)

    sc_out_ref[0] = (put(COL_ERR_T, err_t) + put(COL_NLINK, n_link)
                     + put(COL_NOISE_SQ, noise_sq) + put(COL_KL, kl)
                     + put(COL_ERR_X, err_x) + put(COL_LOSS_T, loss_t_b)
                     + put(COL_L2, l2_b)
                     + put(COL_NEG_LOG_CONST, neg_log_const_b)
                     + put(COL_DLOGPX, dlogpx_b))


def edm_pallas_call(scal, xh_packed, eps_packed, w1_pad, w2_pad, bias_buf):
    Bk, Nk, Dp = xh_packed.shape
    smem = pl.BlockSpec(memory_space=pltpu.MemorySpace.SMEM)
    return pl.pallas_call(
        partial(edm_kernel, n_dims=N_DIMS, d_feat=D_FEAT, n_feat_h=IN_NODE_NF,
                n_nodes=Nk, norm0=NORM_VALUES[0]),
        out_shape=(
            jax.ShapeDtypeStruct((Bk, Nk, Dp), jnp.float32),          # z_t (packed lanes)
            jax.ShapeDtypeStruct((Bk, 1, SCALAR_LANES), jnp.float32),  # packed scalars
        ),
        grid=(Bk,),
        in_specs=[
            smem,                                                      # per-batch scalars
            pl.BlockSpec((1, Nk, Dp), lambda b: (b, 0, 0)),            # xh (+ mask lanes)
            pl.BlockSpec((1, Nk, Dp), lambda b: (b, 0, 0)),            # eps
            pl.BlockSpec((Dp, HID_PAD), lambda b: (0, 0)),             # w1 bf16 (shared)
            pl.BlockSpec((HID_PAD, Dp), lambda b: (0, 0)),             # w2 bf16 (shared)
            pl.BlockSpec((1, 2, HID_PAD), lambda b: (b, 0, 0)),        # [bias1; b2]
        ],
        out_specs=(
            pl.BlockSpec((1, Nk, Dp), lambda b: (b, 0, 0)),
            pl.BlockSpec((1, 1, SCALAR_LANES), lambda b: (b, 0, 0)),
        ),
        compiler_params=pltpu.CompilerParams(
            dimension_semantics=("parallel",),     # shards batch over 2 TCs on v7x
            vmem_limit_bytes=32 * 1024 * 1024),    # explicit; tiny usage, all gens OK
    )(scal, xh_packed, eps_packed, w1_pad, w2_pad, bias_buf)


# ------------------------------- full forward --------------------------------
@jax.jit
def edm_forward(x, h, node_mask, fragment_mask, linker_mask, edge_mask,
                params, gamma_table, key):
    del edge_mask  # synthetic Dynamics MLP is node-wise; edges unused
    w1, w1t, b1, w2, b2 = params
    Bk, Nk, _ = x.shape

    # normalize
    x_n = x / NORM_VALUES[0]
    h_n = (h.astype(jnp.float32) - NORM_BIASES[1]) / NORM_VALUES[1]

    # t sampling
    kt, keps = jax.random.split(key)
    t_int = jax.random.randint(kt, (Bk, 1), 0, T_STEPS + 1).astype(jnp.float32)
    s_int = t_int - 1.0
    t = t_int / T_STEPS
    s = s_int / T_STEPS
    t_is_zero = jnp.squeeze(t_int == 0).astype(jnp.float32)
    t_is_not_zero = 1.0 - t_is_zero

    gamma_t = gamma_lookup(gamma_table, t)
    gamma_s = gamma_lookup(gamma_table, s)
    gamma_0 = gamma_lookup(gamma_table, jnp.zeros((Bk, 1), jnp.float32))
    gamma_T = gamma_lookup(gamma_table, jnp.ones((Bk, 1), jnp.float32))

    # ---- per-batch scalar precompute (tiny; fuses into this jit, SMEM input) -
    sig2_t = jax.nn.sigmoid(gamma_t)
    sig2_T = jax.nn.sigmoid(gamma_T)
    alpha_t = jnp.sqrt(1.0 - sig2_t)
    sigma_t = jnp.sqrt(sig2_t)
    alpha_T2 = 1.0 - sig2_T
    kl_coef = -0.5 * jnp.log(sig2_T) + 0.5 * sig2_T - 0.5
    w_loss_t = 0.5 * T_STEPS * (jnp.exp(gamma_t - gamma_s) - 1.0)
    c0 = 0.5 * gamma_0 + 0.5 * math.log(2.0 * math.pi)
    scal = jnp.concatenate(
        [alpha_t, sigma_t, alpha_T2, kl_coef, w_loss_t, c0,
         jnp.zeros((Bk, N_SMEM_COLS - 6), jnp.float32)], axis=1)       # (B, 8)

    # ---- packed tensor inputs (masks folded into xh lanes; no mask DMAs) ----
    xh_packed = jnp.concatenate([x_n, h_n, node_mask, fragment_mask], axis=2)
    eps_real = jax.random.normal(keps, (Bk, Nk, D_FEAT), dtype=jnp.float32)
    eps_packed = jnp.concatenate(
        [eps_real, jnp.zeros((Bk, Nk, D_PACK - D_FEAT), jnp.float32)], axis=2)

    # shared 2-D bf16 weights, hidden padded to 128 (no per-batch broadcast)
    w1_pad = jnp.zeros((D_PACK, HID_PAD), jnp.float32).at[:D_FEAT, :HIDDEN].set(w1)
    w2_pad = jnp.zeros((HID_PAD, D_PACK), jnp.float32).at[:HIDDEN, :D_FEAT].set(w2)
    w1_pad = w1_pad.astype(jnp.bfloat16)
    w2_pad = w2_pad.astype(jnp.bfloat16)

    # bias1 = t*w1t + b1 (per batch) packed with b2 into one (B, 2, 128) buffer
    bias1 = jnp.zeros((Bk, HID_PAD), jnp.float32).at[:, :HIDDEN].set(t * w1t + b1)
    b2_row = jnp.zeros((Bk, HID_PAD), jnp.float32).at[:, :D_FEAT].set(
        jnp.broadcast_to(b2.reshape(1, D_FEAT), (Bk, D_FEAT)))
    bias_buf = jnp.stack([bias1, b2_row], axis=1)                      # (B, 2, 128)

    z_t_packed, S3 = edm_pallas_call(scal, xh_packed, eps_packed,
                                     w1_pad, w2_pad, bias_buf)
    z_t = z_t_packed[:, :, :D_FEAT]
    S = S3[:, 0, :]

    error_t = S[:, COL_ERR_T]
    noise = jnp.sqrt(S[:, COL_NOISE_SQ])
    kl_b = S[:, COL_KL]
    error_x = S[:, COL_ERR_X]
    loss_t_b = S[:, COL_LOSS_T]
    l2_b = S[:, COL_L2]
    neg_log_constants = S[:, COL_NEG_LOG_CONST]
    dlogpx_b = S[:, COL_DLOGPX]

    delta_log_px = jnp.mean(dlogpx_b)
    l2_loss = jnp.mean(l2_b)
    kl_prior = jnp.mean(kl_b)

    # loss term t (guard against the rare all-t==0 batch; torch would NaN here)
    n_not0 = t_is_not_zero.sum()
    denom_t = jnp.maximum(n_not0, 1.0)
    loss_term_t = jnp.where(n_not0 > 0,
                            (loss_t_b * t_is_not_zero).sum() / denom_t, 0.0)
    noise_t = jnp.where(n_not0 > 0,
                        (noise * t_is_not_zero).sum() / denom_t, 0.0)

    # ---- loss term 0 (only contributes when t_int == 0) ---------------------
    # TODO(synk): erf / logsumexp tail kept in plain JAX glue (fuses into this
    #             jit region around the single pallas_call).
    # NOTE: the reference passes gamma_t (not gamma_0) into
    #       log_p_xh_given_z0_without_constants; that is only consistent because
    #       the term is masked to batches with t_int == 0 (gamma_t == gamma_0).
    z_h = z_t[:, :, N_DIMS:]
    sigma_0 = jnp.sqrt(sig2_t).reshape(Bk, 1, 1) * NORM_VALUES[1]
    h_un = h.astype(jnp.float32) * NORM_VALUES[1] + NORM_BIASES[1]
    estimated_h = z_h * NORM_VALUES[1] + NORM_BIASES[1]
    centered_h = estimated_h - 1.0

    def cdf_std_gaussian(v):
        return 0.5 * (1.0 + erf(v / math.sqrt(2.0)))

    log_ph_prop = jnp.log(cdf_std_gaussian((centered_h + 0.5) / sigma_0)
                          - cdf_std_gaussian((centered_h - 0.5) / sigma_0) + 1e-10)
    log_Z = logsumexp(log_ph_prop, axis=2, keepdims=True)
    log_probs = log_ph_prop - log_Z
    log_p_h = jnp.sum((log_probs * h_un * linker_mask).reshape(Bk, -1), axis=-1)
    log_p_x = -0.5 * error_x
    loss0_per_batch = -(log_p_x + log_p_h) + neg_log_constants

    n0 = t_is_zero.sum()
    denom0 = jnp.maximum(n0, 1.0)
    loss_term_0 = jnp.where(n0 > 0, (loss0_per_batch * t_is_zero).sum() / denom0, 0.0)
    noise_0 = jnp.where(n0 > 0, (noise * t_is_zero).sum() / denom0, 0.0)

    return (delta_log_px, kl_prior, loss_term_t, loss_term_0,
            l2_loss, noise_t, noise_0)


# ----------------------------------- main -------------------------------------
if __name__ == "__main__":
    root = jax.random.PRNGKey(0)
    kx, kh, kw1, kw1t, kw2, kfwd = jax.random.split(root, 6)

    # synthetic molecular-graph inputs
    x = jax.random.normal(kx, (B, N_NODES, N_DIMS), dtype=jnp.float32)
    h_cat = jax.random.randint(kh, (B, N_NODES), 0, IN_NODE_NF)
    h = jax.nn.one_hot(h_cat, IN_NODE_NF, dtype=jnp.float32)
    node_mask = jnp.ones((B, N_NODES, 1), dtype=jnp.float32)
    frag = (jnp.arange(N_NODES) < N_NODES // 2).astype(jnp.float32).reshape(1, N_NODES, 1)
    fragment_mask = jnp.broadcast_to(frag, (B, N_NODES, 1))
    linker_mask = node_mask - fragment_mask
    edge_mask = jnp.ones((B, N_NODES * N_NODES, 1), dtype=jnp.float32)

    # deterministic synthetic Dynamics parameters
    w1 = 0.1 * jax.random.normal(kw1, (D_FEAT, HIDDEN), dtype=jnp.float32)
    w1t = 0.1 * jax.random.normal(kw1t, (1, HIDDEN), dtype=jnp.float32)
    b1 = jnp.zeros((1, HIDDEN), dtype=jnp.float32)
    w2 = 0.1 * jax.random.normal(kw2, (HIDDEN, D_FEAT), dtype=jnp.float32)
    b2 = jnp.zeros((1, D_FEAT), dtype=jnp.float32)

    gamma_table = make_gamma_table(T_STEPS, precision=1e-4)

    outs = edm_forward(x, h, node_mask, fragment_mask, linker_mask, edge_mask,
                       (w1, w1t, b1, w2, b2), gamma_table, kfwd)
    outs = jax.block_until_ready(outs)
    print("KERNEL_OK")
</pallas_src>

<mosaic_0001>
module attributes {stable_mosaic.version = 11 : i64} {
  func.func @edm_kernel(%arg0: i32, %arg1: memref<2x8xf32, #tpu.memory_space<smem>>, %arg2: memref<1x8x10xf32, #tpu.memory_space<vmem>>, %arg3: memref<1x8x10xf32, #tpu.memory_space<vmem>>, %arg4: memref<10x128xbf16, #tpu.memory_space<vmem>>, %arg5: memref<128x10xbf16, #tpu.memory_space<vmem>>, %arg6: memref<1x2x128xf32, #tpu.memory_space<vmem>>, %arg7: memref<1x8x10xf32, #tpu.memory_space<vmem>>, %arg8: memref<1x1x128xf32, #tpu.memory_space<vmem>>) attributes {dimension_semantics = [#tpu.dimension_semantics<parallel>], iteration_bounds = array<i64: 2>, scalar_prefetch = 0 : i64, scratch_operands = 0 : i64, tpu.core_type = #tpu.core_type<tc>, window_params = [{transform_indices = @transform_0, window_bounds = array<i64: 2, 8>}, {transform_indices = @transform_1, window_bounds = array<i64: 1, 8, 10>}, {transform_indices = @transform_2, window_bounds = array<i64: 1, 8, 10>}, {pipeline_mode = #tpu.pipeline_mode<synchronous>, transform_indices = @transform_3, window_bounds = array<i64: 10, 128>}, {pipeline_mode = #tpu.pipeline_mode<synchronous>, transform_indices = @transform_4, window_bounds = array<i64: 128, 10>}, {transform_indices = @transform_5, window_bounds = array<i64: 1, 2, 128>}, {transform_indices = @transform_6, window_bounds = array<i64: 1, 8, 10>}, {transform_indices = @transform_7, window_bounds = array<i64: 1, 1, 128>}]} {
    %0 = arith.index_cast %arg0 : i32 to index
    %c0 = arith.constant 0 : index
    %1 = memref.load %arg1[%0, %c0] : memref<2x8xf32, #tpu.memory_space<smem>>
    %2 = arith.index_cast %arg0 : i32 to index
    %c1 = arith.constant 1 : index
    %3 = memref.load %arg1[%2, %c1] : memref<2x8xf32, #tpu.memory_space<smem>>
    %4 = arith.index_cast %arg0 : i32 to index
    %c2 = arith.constant 2 : index
    %5 = memref.load %arg1[%4, %c2] : memref<2x8xf32, #tpu.memory_space<smem>>
    %6 = arith.index_cast %arg0 : i32 to index
    %c3 = arith.constant 3 : index
    %7 = memref.load %arg1[%6, %c3] : memref<2x8xf32, #tpu.memory_space<smem>>
    %8 = arith.index_cast %arg0 : i32 to index
    %c4 = arith.constant 4 : index
    %9 = memref.load %arg1[%8, %c4] : memref<2x8xf32, #tpu.memory_space<smem>>
    %10 = arith.index_cast %arg0 : i32 to index
    %c5 = arith.constant 5 : index
    %11 = memref.load %arg1[%10, %c5] : memref<2x8xf32, #tpu.memory_space<smem>>
    %c0_0 = arith.constant 0 : index
    %c0_1 = arith.constant 0 : index
    %c0_2 = arith.constant 0 : index
    %12 = vector.load %arg2[%c0_0, %c0_1, %c0_2] : memref<1x8x10xf32, #tpu.memory_space<vmem>>, vector<1x8x10xf32>
    %13 = vector.shape_cast %12 : vector<1x8x10xf32> to vector<8x10xf32>
    %c0_3 = arith.constant 0 : index
    %c0_4 = arith.constant 0 : index
    %c0_5 = arith.constant 0 : index
    %14 = vector.load %arg3[%c0_3, %c0_4, %c0_5] : memref<1x8x10xf32, #tpu.memory_space<vmem>>, vector<1x8x10xf32>
    %15 = vector.shape_cast %14 : vector<1x8x10xf32> to vector<8x10xf32>
    %16 = vector.extract_strided_slice %13 {offsets = [0, 8], sizes = [8, 1], strides = [1, 1]} : vector<8x10xf32> to vector<8x1xf32>
    %17 = vector.extract_strided_slice %13 {offsets = [0, 9], sizes = [8, 1], strides = [1, 1]} : vector<8x10xf32> to vector<8x1xf32>
    %18 = arith.subf %16, %17 : vector<8x1xf32>
    %19 = vector.broadcast %18 : vector<8x1xf32> to vector<8x10xf32>
    %20 = arith.mulf %15, %19 : vector<8x10xf32>
    %21 = vector.broadcast %1 : f32 to vector<8x10xf32>
    %22 = arith.mulf %21, %13 : vector<8x10xf32>
    %23 = vector.broadcast %3 : f32 to vector<8x10xf32>
    %24 = arith.mulf %23, %20 : vector<8x10xf32>
    %25 = arith.addf %22, %24 : vector<8x10xf32>
    %26 = vector.broadcast %17 : vector<8x1xf32> to vector<8x10xf32>
    %27 = arith.mulf %13, %26 : vector<8x10xf32>
    %28 = vector.broadcast %18 : vector<8x1xf32> to vector<8x10xf32>
    %29 = arith.mulf %25, %28 : vector<8x10xf32>
    %30 = arith.addf %27, %29 : vector<8x10xf32>
    %c0_6 = arith.constant 0 : index
    %c0_7 = arith.constant 0 : index
    %c0_8 = arith.constant 0 : index
    %31 = vector.load %arg7[%c0_6, %c0_7, %c0_8] : memref<1x8x10xf32, #tpu.memory_space<vmem>>, vector<1x8x10xf32>
    %32 = vector.shape_cast %31 : vector<1x8x10xf32> to vector<8x10xf32>
    %33 = vector.shape_cast %30 : vector<8x10xf32> to vector<1x8x10xf32>
    tpu.vector_store %arg7[%c0_6, %c0_7, %c0_8], %33 {strides = array<i32>} : memref<1x8x10xf32, #tpu.memory_space<vmem>>, vector<1x8x10xf32>,
    %c0_9 = arith.constant 0 : index
    %c0_10 = arith.constant 0 : index
    %c0_11 = arith.constant 0 : index
    %34 = vector.load %arg6[%c0_9, %c0_10, %c0_11] : memref<1x2x128xf32, #tpu.memory_space<vmem>>, vector<1x2x128xf32>
    %35 = vector.shape_cast %34 : vector<1x2x128xf32> to vector<2x128xf32>
    %36 = vector.extract_strided_slice %35 {offsets = [0, 0], sizes = [1, 128], strides = [1, 1]} : vector<2x128xf32> to vector<1x128xf32>
    %37 = vector.extract_strided_slice %35 {offsets = [1, 0], sizes = [1, 10], strides = [1, 1]} : vector<2x128xf32> to vector<1x10xf32>
    %38 = arith.truncf %30 : vector<8x10xf32> to vector<8x10xbf16>
    %c0_12 = arith.constant 0 : index
    %c0_13 = arith.constant 0 : index
    %39 = vector.load %arg4[%c0_12, %c0_13] : memref<10x128xbf16, #tpu.memory_space<vmem>>, vector<10x128xbf16>
    %cst = arith.constant dense<0.000000e+00> : vector<8x128xf32>
    %40 = tpu.matmul %38, %39, %cst {dimension_numbers = #tpu.dot_dimension_numbers<[1], [0], [0], [1], [0, 0, 1, 1], [], []>} : vector<8x10xbf16>, vector<10x128xbf16>, vector<8x128xf32> -> vector<8x128xf32>
    %41 = vector.broadcast %36 : vector<1x128xf32> to vector<8x128xf32>
    %42 = arith.addf %40, %41 : vector<8x128xf32>
    %43 = arith.negf %42 : vector<8x128xf32>
    %44 = math.exp %43 : vector<8x128xf32>
    %cst_14 = arith.constant 1.000000e+00 : f32
    %45 = vector.broadcast %cst_14 : f32 to vector<8x128xf32>
    %46 = arith.addf %45, %44 : vector<8x128xf32>
    %47 = arith.divf %45, %46 : vector<8x128xf32>
    %48 = arith.mulf %42, %47 : vector<8x128xf32>
    %49 = arith.truncf %48 : vector<8x128xf32> to vector<8x128xbf16>
    %c0_15 = arith.constant 0 : index
    %c0_16 = arith.constant 0 : index
    %50 = vector.load %arg5[%c0_15, %c0_16] : memref<128x10xbf16, #tpu.memory_space<vmem>>, vector<128x10xbf16>
    %cst_17 = arith.constant dense<0.000000e+00> : vector<8x10xf32>
    %51 = tpu.matmul %49, %50, %cst_17 {dimension_numbers = #tpu.dot_dimension_numbers<[1], [0], [0], [1], [0, 0, 1, 1], [], []>} : vector<8x128xbf16>, vector<128x10xbf16>, vector<8x10xf32> -> vector<8x10xf32>
    %52 = vector.broadcast %37 : vector<1x10xf32> to vector<8x10xf32>
    %53 = arith.addf %51, %52 : vector<8x10xf32>
    %54 = vector.broadcast %18 : vector<8x1xf32> to vector<8x10xf32>
    %55 = arith.mulf %53, %54 : vector<8x10xf32>
    %56 = tpu.iota {dimensions = array<i32: 1>} : vector<1x10xi32>
    %c3_i32 = arith.constant 3 : i32
    %57 = vector.broadcast %c3_i32 : i32 to vector<1x10xi32>
    %58 = arith.cmpi slt, %56, %57 : vector<1x10xi32>
    %59 = arith.extui %58 : vector<1x10xi1> to vector<1x10xi32>
    %60 = arith.sitofp %59 : vector<1x10xi32> to vector<1x10xf32>
    %c8_i32 = arith.constant 8 : i32
    %61 = vector.broadcast %c8_i32 : i32 to vector<1x10xi32>
    %62 = arith.cmpi slt, %56, %61 : vector<1x10xi32>
    %63 = arith.extui %62 : vector<1x10xi1> to vector<1x10xi32>
    %64 = arith.sitofp %63 : vector<1x10xi32> to vector<1x10xf32>
    %65 = arith.subf %20, %55 : vector<8x10xf32>
    %66 = arith.mulf %65, %65 : vector<8x10xf32>
    %67 = vector.shape_cast %66 : vector<8x10xf32> to vector<1x8x10xf32>
    %cst_18 = arith.constant dense<0.000000e+00> : vector<1xf32>
    %68 = vector.multi_reduction <add>, %67, %cst_18 [1, 2] : vector<1x8x10xf32> to vector<1xf32>
    %69 = vector.shape_cast %68 : vector<1xf32> to vector<1x1x1xf32>
    %70 = vector.extract %69[0, 0, 0] : f32 from vector<1x1x1xf32>
    %71 = vector.broadcast %70 : f32 to vector<1x1xf32>
    %72 = vector.broadcast %60 : vector<1x10xf32> to vector<8x10xf32>
    %73 = arith.mulf %66, %72 : vector<8x10xf32>
    %74 = vector.shape_cast %73 : vector<8x10xf32> to vector<1x8x10xf32>
    %cst_19 = arith.constant dense<0.000000e+00> : vector<1xf32>
    %75 = vector.multi_reduction <add>, %74, %cst_19 [1, 2] : vector<1x8x10xf32> to vector<1xf32>
    %76 = vector.shape_cast %75 : vector<1xf32> to vector<1x1x1xf32>
    %77 = vector.extract %76[0, 0, 0] : f32 from vector<1x1x1xf32>
    %78 = vector.broadcast %77 : f32 to vector<1x1xf32>
    %79 = vector.shape_cast %18 : vector<8x1xf32> to vector<1x8x1xf32>
    %cst_20 = arith.constant dense<0.000000e+00> : vector<1xf32>
    %80 = vector.multi_reduction <add>, %79, %cst_20 [1, 2] : vector<1x8x1xf32> to vector<1xf32>
    %81 = vector.shape_cast %80 : vector<1xf32> to vector<1x1x1xf32>
    %82 = vector.extract %81[0, 0, 0] : f32 from vector<1x1x1xf32>
    %83 = vector.broadcast %82 : f32 to vector<1x1xf32>
    %84 = arith.mulf %55, %55 : vector<8x10xf32>
    %85 = vector.shape_cast %84 : vector<8x10xf32> to vector<1x8x10xf32>
    %cst_21 = arith.constant dense<0.000000e+00> : vector<1xf32>
    %86 = vector.multi_reduction <add>, %85, %cst_21 [1, 2] : vector<1x8x10xf32> to vector<1xf32>
    %87 = vector.shape_cast %86 : vector<1xf32> to vector<1x1x1xf32>
    %88 = vector.extract %87[0, 0, 0] : f32 from vector<1x1x1xf32>
    %89 = vector.broadcast %88 : f32 to vector<1x1xf32>
    %90 = arith.mulf %13, %13 : vector<8x10xf32>
    %91 = vector.broadcast %64 : vector<1x10xf32> to vector<8x10xf32>
    %92 = arith.mulf %90, %91 : vector<8x10xf32>
    %93 = vector.shape_cast %92 : vector<8x10xf32> to vector<1x8x10xf32>
    %cst_22 = arith.constant dense<0.000000e+00> : vector<1xf32>
    %94 = vector.multi_reduction <add>, %93, %cst_22 [1, 2] : vector<1x8x10xf32> to vector<1xf32>
    %95 = vector.shape_cast %94 : vector<1xf32> to vector<1x1x1xf32>
    %96 = vector.extract %95[0, 0, 0] : f32 from vector<1x1x1xf32>
    %97 = vector.broadcast %96 : f32 to vector<1x1xf32>
    %cst_23 = arith.constant 3.000000e+00 : f32
    %98 = vector.broadcast %cst_23 : f32 to vector<1x1xf32>
    %99 = arith.mulf %83, %98 : vector<1x1xf32>
    %cst_24 = arith.constant 4.000000e+01 : f32
    %100 = vector.broadcast %cst_24 : f32 to vector<1x1xf32>
    %101 = arith.addf %99, %100 : vector<1x1xf32>
    %102 = vector.broadcast %7 : f32 to vector<1x1xf32>
    %103 = arith.mulf %102, %101 : vector<1x1xf32>
    %cst_25 = arith.constant 5.000000e-01 : f32
    %104 = arith.mulf %cst_25, %5 : f32
    %105 = vector.broadcast %104 : f32 to vector<1x1xf32>
    %106 = arith.mulf %105, %97 : vector<1x1xf32>
    %107 = arith.addf %103, %106 : vector<1x1xf32>
    %108 = vector.broadcast %9 : f32 to vector<1x1xf32>
    %109 = arith.mulf %108, %71 : vector<1x1xf32>
    %cst_26 = arith.constant 1.000000e+00 : f32
    %110 = vector.broadcast %cst_26 : f32 to vector<1x1xf32>
    %111 = arith.maximumf %83, %110 : vector<1x1xf32>
    %cst_27 = arith.constant 8.000000e+00 : f32
    %112 = vector.broadcast %cst_27 : f32 to vector<1x1xf32>
    %113 = arith.mulf %112, %111 : vector<1x1xf32>
    %114 = arith.divf %71, %113 : vector<1x1xf32>
    %115 = vector.broadcast %11 : f32 to vector<1x1xf32>
    %116 = arith.mulf %115, %99 : vector<1x1xf32>
    %cst_28 = arith.constant -0.000000e+00 : f32
    %117 = vector.broadcast %cst_28 : f32 to vector<1x1xf32>
    %118 = arith.mulf %117, %99 : vector<1x1xf32>
    %119 = tpu.iota {dimensions = array<i32: 1>} : vector<1x128xi32>
    %c0_i32 = arith.constant 0 : i32
    %120 = vector.broadcast %c0_i32 : i32 to vector<1x128xi32>
    %121 = arith.cmpi eq, %119, %120 : vector<1x128xi32>
    %cst_29 = arith.constant 0.000000e+00 : f32
    %122 = vector.shape_cast %71 : vector<1x1xf32> to vector<1x1xf32>
    %123 = vector.broadcast %122 : vector<1x1xf32> to vector<1x128xf32>
    %124 = vector.broadcast %cst_29 : f32 to vector<1x128xf32>
    %125 = arith.select %121, %123, %124 : vector<1x128xi1>, vector<1x128xf32>
    %c1_i32 = arith.constant 1 : i32
    %126 = vector.broadcast %c1_i32 : i32 to vector<1x128xi32>
    %127 = arith.cmpi eq, %119, %126 : vector<1x128xi32>
    %cst_30 = arith.constant 0.000000e+00 : f32
    %128 = vector.shape_cast %83 : vector<1x1xf32> to vector<1x1xf32>
    %129 = vector.broadcast %128 : vector<1x1xf32> to vector<1x128xf32>
    %130 = vector.broadcast %cst_30 : f32 to vector<1x128xf32>
    %131 = arith.select %127, %129, %130 : vector<1x128xi1>, vector<1x128xf32>
    %132 = arith.addf %125, %131 : vector<1x128xf32>
    %c2_i32 = arith.constant 2 : i32
    %133 = vector.broadcast %c2_i32 : i32 to vector<1x128xi32>
    %134 = arith.cmpi eq, %119, %133 : vector<1x128xi32>
    %cst_31 = arith.constant 0.000000e+00 : f32
    %135 = vector.shape_cast %89 : vector<1x1xf32> to vector<1x1xf32>
    %136 = vector.broadcast %135 : vector<1x1xf32> to vector<1x128xf32>
    %137 = vector.broadcast %cst_31 : f32 to vector<1x128xf32>
    %138 = arith.select %134, %136, %137 : vector<1x128xi1>, vector<1x128xf32>
    %139 = arith.addf %132, %138 : vector<1x128xf32>
    %c3_i32_32 = arith.constant 3 : i32
    %140 = vector.broadcast %c3_i32_32 : i32 to vector<1x128xi32>
    %141 = arith.cmpi eq, %119, %140 : vector<1x128xi32>
    %cst_33 = arith.constant 0.000000e+00 : f32
    %142 = vector.shape_cast %107 : vector<1x1xf32> to vector<1x1xf32>
    %143 = vector.broadcast %142 : vector<1x1xf32> to vector<1x128xf32>
    %144 = vector.broadcast %cst_33 : f32 to vector<1x128xf32>
    %145 = arith.select %141, %143, %144 : vector<1x128xi1>, vector<1x128xf32>
    %146 = arith.addf %139, %145 : vector<1x128xf32>
    %c4_i32 = arith.constant 4 : i32
    %147 = vector.broadcast %c4_i32 : i32 to vector<1x128xi32>
    %148 = arith.cmpi eq, %119, %147 : vector<1x128xi32>
    %cst_34 = arith.constant 0.000000e+00 : f32
    %149 = vector.shape_cast %78 : vector<1x1xf32> to vector<1x1xf32>
    %150 = vector.broadcast %149 : vector<1x1xf32> to vector<1x128xf32>
    %151 = vector.broadcast %cst_34 : f32 to vector<1x128xf32>
    %152 = arith.select %148, %150, %151 : vector<1x128xi1>, vector<1x128xf32>
    %153 = arith.addf %146, %152 : vector<1x128xf32>
    %c5_i32 = arith.constant 5 : i32
    %154 = vector.broadcast %c5_i32 : i32 to vector<1x128xi32>
    %155 = arith.cmpi eq, %119, %154 : vector<1x128xi32>
    %cst_35 = arith.constant 0.000000e+00 : f32
    %156 = vector.shape_cast %109 : vector<1x1xf32> to vector<1x1xf32>
    %157 = vector.broadcast %156 : vector<1x1xf32> to vector<1x128xf32>
    %158 = vector.broadcast %cst_35 : f32 to vector<1x128xf32>
    %159 = arith.select %155, %157, %158 : vector<1x128xi1>, vector<1x128xf32>
    %160 = arith.addf %153, %159 : vector<1x128xf32>
    %c6_i32 = arith.constant 6 : i32
    %161 = vector.broadcast %c6_i32 : i32 to vector<1x128xi32>
    %162 = arith.cmpi eq, %119, %161 : vector<1x128xi32>
    %cst_36 = arith.constant 0.000000e+00 : f32
    %163 = vector.shape_cast %114 : vector<1x1xf32> to vector<1x1xf32>
    %164 = vector.broadcast %163 : vector<1x1xf32> to vector<1x128xf32>
    %165 = vector.broadcast %cst_36 : f32 to vector<1x128xf32>
    %166 = arith.select %162, %164, %165 : vector<1x128xi1>, vector<1x128xf32>
    %167 = arith.addf %160, %166 : vector<1x128xf32>
    %c7_i32 = arith.constant 7 : i32
    %168 = vector.broadcast %c7_i32 : i32 to vector<1x128xi32>
    %169 = arith.cmpi eq, %119, %168 : vector<1x128xi32>
    %cst_37 = arith.constant 0.000000e+00 : f32
    %170 = vector.shape_cast %116 : vector<1x1xf32> to vector<1x1xf32>
    %171 = vector.broadcast %170 : vector<1x1xf32> to vector<1x128xf32>
    %172 = vector.broadcast %cst_37 : f32 to vector<1x128xf32>
    %173 = arith.select %169, %171, %172 : vector<1x128xi1>, vector<1x128xf32>
    %174 = arith.addf %167, %173 : vector<1x128xf32>
    %c8_i32_38 = arith.constant 8 : i32
    %175 = vector.broadcast %c8_i32_38 : i32 to vector<1x128xi32>
    %176 = arith.cmpi eq, %119, %175 : vector<1x128xi32>
    %cst_39 = arith.constant 0.000000e+00 : f32
    %177 = vector.shape_cast %118 : vector<1x1xf32> to vector<1x1xf32>
    %178 = vector.broadcast %177 : vector<1x1xf32> to vector<1x128xf32>
    %179 = vector.broadcast %cst_39 : f32 to vector<1x128xf32>
    %180 = arith.select %176, %178, %179 : vector<1x128xi1>, vector<1x128xf32>
    %181 = arith.addf %174, %180 : vector<1x128xf32>
    %c0_40 = arith.constant 0 : index
    %c0_41 = arith.constant 0 : index
    %c0_42 = arith.constant 0 : index
    %182 = vector.load %arg8[%c0_40, %c0_41, %c0_42] : memref<1x1x128xf32, #tpu.memory_space<vmem>>, vector<1x1x128xf32>
    %183 = vector.shape_cast %182 : vector<1x1x128xf32> to vector<1x128xf32>
    %184 = vector.shape_cast %181 : vector<1x128xf32> to vector<1x1x128xf32>
    tpu.vector_store %arg8[%c0_40, %c0_41, %c0_42], %184 {strides = array<i32>} : memref<1x1x128xf32, #tpu.memory_space<vmem>>, vector<1x1x128xf32>,
    return
  }
  func.func @transform_0(%arg0: i32) -> (i32, i32) {
    %c0_i32 = arith.constant 0 : i32
    %c0_i32_0 = arith.constant 0 : i32
    %c0_i32_1 = arith.constant 0 : i32
    return %c0_i32, %c0_i32_0 : i32, i32
  }
  func.func @transform_1(%arg0: i32) -> (i32, i32, i32) {
    %c0_i32 = arith.constant 0 : i32
    %c0_i32_0 = arith.constant 0 : i32
    %c0_i32_1 = arith.constant 0 : i32
    return %arg0, %c0_i32, %c0_i32_0 : i32, i32, i32
  }
  func.func @transform_2(%arg0: i32) -> (i32, i32, i32) {
    %c0_i32 = arith.constant 0 : i32
    %c0_i32_0 = arith.constant 0 : i32
    %c0_i32_1 = arith.constant 0 : i32
    return %arg0, %c0_i32, %c0_i32_0 : i32, i32, i32
  }
  func.func @transform_3(%arg0: i32) -> (i32, i32) {
    %c0_i32 = arith.constant 0 : i32
    %c0_i32_0 = arith.constant 0 : i32
    %c0_i32_1 = arith.constant 0 : i32
    return %c0_i32, %c0_i32_0 : i32, i32
  }
  func.func @transform_4(%arg0: i32) -> (i32, i32) {
    %c0_i32 = arith.constant 0 : i32
    %c0_i32_0 = arith.constant 0 : i32
    %c0_i32_1 = arith.constant 0 : i32
    return %c0_i32, %c0_i32_0 : i32, i32
  }
  func.func @transform_5(%arg0: i32) -> (i32, i32, i32) {
    %c0_i32 = arith.constant 0 : i32
    %c0_i32_0 = arith.constant 0 : i32
    %c0_i32_1 = arith.constant 0 : i32
    return %arg0, %c0_i32, %c0_i32_0 : i32, i32, i32
  }
  func.func @transform_6(%arg0: i32) -> (i32, i32, i32) {
    %c0_i32 = arith.constant 0 : i32
    %c0_i32_0 = arith.constant 0 : i32
    %c0_i32_1 = arith.constant 0 : i32
    return %arg0, %c0_i32, %c0_i32_0 : i32, i32, i32
  }
  func.func @transform_7(%arg0: i32) -> (i32, i32, i32) {
    %c0_i32 = arith.constant 0 : i32
    %c0_i32_0 = arith.constant 0 : i32
    %c0_i32_1 = arith.constant 0 : i32
    return %arg0, %c0_i32, %c0_i32_0 : i32, i32, i32
  }
}

</mosaic_0001>

<llo_original>
// kernel: edm_forward.1
$region0: #{edm_forward.1}
  #allocation0 [shape = 'u32[]', space=smem, size = 0x4, offset = 0x4, fixed_abs, tag = 'smem constant byte address 0x4 - core index']
  #allocation1 [shape = 'u32[144,128]{1,0:T(1,128)}', space=vmem, size = 0x12000, scoped, tag = 'internal scratch']
  %s0 = inlined_call_operand.vmem [shape: f32[2,8], index: 0, kind: input, shape index: {}]
  %s1 = inlined_call_operand.vmem [shape: f32[2,8,10], index: 1, kind: input, shape index: {}]
  %s2 = inlined_call_operand.vmem [shape: f32[2,8,10], index: 2, kind: input, shape index: {}]
  %s3 = inlined_call_operand.vmem [shape: bf16[10,128], index: 3, kind: input, shape index: {}]
  %s4 = inlined_call_operand.vmem [shape: bf16[128,10], index: 4, kind: input, shape index: {}]
  %s5 = inlined_call_operand.vmem [shape: f32[2,2,128], index: 5, kind: input, shape index: {}]
  %s6 = inlined_call_operand.vmem [shape: f32[2,8,10], index: 6, kind: output, shape index: {0}]
  %s7 = inlined_call_operand.vmem [shape: f32[2,1,128], index: 7, kind: output, shape index: {1}]
  %8 = xla_tuple %s6, %s7
  %s9 = sld [smem:[#allocation0]]
  $region69: #{edm_forward.1} parent=0
    _
  %s11 = ssub.s32 1, %s9
  %s12 = scalar_select 0, %s11, %s9
  $region1: #{edm_forward.1} parent=0
    #allocation2 [shape = 'u8[1024]{0}', space=smem, size = 0x400, scoped, tag = 'input window, operand 0, single buffered']
    #allocation3 [shape = 's32[2]{0}', space=sflag, size = 0x8, scoped, tag = 'scoped memory for edm_forward.1']
    %13 = vsyncpa [#allocation3], 0
    loop: start=0, step=1, limit=4
    $region2: #{edm_forward.1} parent=1 // loop_pre_header
      _
    $region3: #{edm_forward.1} parent=1 // loop_header
      %s15 = sphi 0, %s19
      %p16 = scmp.ge.s32.totalorder %s15, 4
      %s23 = sphi 0, %s23
      %s25 = sphi 0, %s23
      %s26 = sphi 0, %s25
      %s40 = sphi 0, %s26
      %s46 = sphi 0, %s48
      %s49 = sphi 0, %s46
      %s50 = sphi 0, %s49
      %s66 = sphi 0, %s50
      %s72 = sphi 0, %s74
      %s75 = sphi 0, %s72
      %s76 = sphi 0, %s75
      %s92 = sphi 0, %s76
      %s96 = sphi 0, %s96
      %s98 = sphi 0, %s96
      %s99 = sphi 0, %s98
      %s113 = sphi 0, %s99
      %s117 = sphi 0, %s117
      %s119 = sphi 0, %s117
      %s120 = sphi 0, %s119
      %s134 = sphi 0, %s120
      %s140 = sphi 0, %s142
      %s143 = sphi 0, %s140
      %s144 = sphi 0, %s143
      %s160 = sphi 0, %s144
      %s166 = sphi 0, %s168
      %s169 = sphi 0, %s166
      %s170 = sphi 0, %s169
      %s186 = sphi 0, %s170
      %s192 = sphi 0, %s194
      %s195 = sphi 0, %s192
      %s196 = sphi 0, %s195
      %s212 = sphi 0, %s196
    $region4: #{edm_forward.1} parent=1 // loop_header_branch
      %18 = sbr.rel (%p16) target = $region8
    $region5: #{edm_forward.1} parent=1 // loop_body
      %s20 = ssub.s32 %s15, 1
      %s21 = ssub.s32 %s15, 2
      %s22 = sadd.s32 %s15, 1
      %s24 = sadd.s32 %s23, 1
      %p27 = scmp.eq.s32.totalorder %s15, 1
      %p28 = scmp.ne.s32.totalorder %s23, %s25
      %p29 = scmp.eq.s32.totalorder %s15, 0
      %p30 = por %p28, %p29
      %p31 = scmp.ne.s32.totalorder %s23, %s25
      %p32 = scmp.eq.s32.totalorder %s20, 1
      %p33 = por %p31, %p32
      %p34 = scmp.ne.s32.totalorder %s25, %s26
      %p35 = scmp.eq.s32.totalorder %s20, 0
      %p36 = por %p34, %p35
      %p37 = scmp.ne.s32.totalorder %s25, %s26
      %p38 = scmp.eq.s32.totalorder %s21, 1
      %p39 = por %p37, %p38
      %p41 = scmp.ne.s32.totalorder %s26, %s40
      %p42 = scmp.eq.s32.totalorder %s21, 0
      %p43 = por %p41, %p42
      %s44 = ssub.s32 %s15, %s22
      %p45 = scmp.eq.s32.totalorder %s44, 0
      %s47 = sadd.s32 %s46, 1
      %s48 = scalar_select %p45, %s46, %s47
      %p51 = pneg %p45
      %p52 = scmp.eq.s32.totalorder %s15, 1
      %p53 = por %p51, %p52
      %p54 = scmp.ne.s32.totalorder %s46, %s49
      %p55 = scmp.eq.s32.totalorder %s15, 0
      %p56 = por %p54, %p55
      %p57 = scmp.ne.s32.totalorder %s46, %s49
      %p58 = scmp.eq.s32.totalorder %s20, 1
      %p59 = por %p57, %p58
      %p60 = scmp.ne.s32.totalorder %s49, %s50
      %p61 = scmp.eq.s32.totalorder %s20, 0
      %p62 = por %p60, %p61
      %p63 = scmp.ne.s32.totalorder %s49, %s50
      %p64 = scmp.eq.s32.totalorder %s21, 1
      %p65 = por %p63, %p64
      %p67 = scmp.ne.s32.totalorder %s50, %s66
      %p68 = scmp.eq.s32.totalorder %s21, 0
      %p69 = por %p67, %p68
      %s70 = ssub.s32 %s15, %s22
      %p71 = scmp.eq.s32.totalorder %s70, 0
      %s73 = sadd.s32 %s72, 1
      %s74 = scalar_select %p71, %s72, %s73
      %p77 = pneg %p71
      %p78 = scmp.eq.s32.totalorder %s15, 1
      %p79 = por %p77, %p78
      %p80 = scmp.ne.s32.totalorder %s72, %s75
      %p81 = scmp.eq.s32.totalorder %s15, 0
      %p82 = por %p80, %p81
      %p83 = scmp.ne.s32.totalorder %s72, %s75
      %p84 = scmp.eq.s32.totalorder %s20, 1
      %p85 = por %p83, %p84
      %p86 = scmp.ne.s32.totalorder %s75, %s76
      %p87 = scmp.eq.s32.totalorder %s20, 0
      %p88 = por %p86, %p87
      %p89 = scmp.ne.s32.totalorder %s75, %s76
      %p90 = scmp.eq.s32.totalorder %s21, 1
      %p91 = por %p89, %p90
      %p93 = scmp.ne.s32.totalorder %s76, %s92
      %p94 = scmp.eq.s32.totalorder %s21, 0
      %p95 = por %p93, %p94
      %s97 = sadd.s32 %s96, 1
      %p100 = scmp.eq.s32.totalorder %s15, 1
      %p101 = scmp.ne.s32.totalorder %s96, %s98
      %p102 = scmp.eq.s32.totalorder %s15, 0
      %p103 = por %p101, %p102
      %p104 = scmp.ne.s32.totalorder %s96, %s98
      %p105 = scmp.eq.s32.totalorder %s20, 1
      %p106 = por %p104, %p105
      %p107 = scmp.ne.s32.totalorder %s98, %s99
      %p108 = scmp.eq.s32.totalorder %s20, 0
      %p109 = por %p107, %p108
      %p110 = scmp.ne.s32.totalorder %s98, %s99
      %p111 = scmp.eq.s32.totalorder %s21, 1
      %p112 = por %p110, %p111
      %p114 = scmp.ne.s32.totalorder %s99, %s113
      %p115 = scmp.eq.s32.totalorder %s21, 0
      %p116 = por %p114, %p115
      %s118 = sadd.s32 %s117, 1
      %p121 = scmp.eq.s32.totalorder %s15, 1
      %p122 = scmp.ne.s32.totalorder %s117, %s119
      %p123 = scmp.eq.s32.totalorder %s15, 0
      %p124 = por %p122, %p123
      %p125 = scmp.ne.s32.totalorder %s117, %s119
      %p126 = scmp.eq.s32.totalorder %s20, 1
      %p127 = por %p125, %p126
      %p128 = scmp.ne.s32.totalorder %s119, %s120
      %p129 = scmp.eq.s32.totalorder %s20, 0
      %p130 = por %p128, %p129
      %p131 = scmp.ne.s32.totalorder %s119, %s120
      %p132 = scmp.eq.s32.totalorder %s21, 1
      %p133 = por %p131, %p132
      %p135 = scmp.ne.s32.totalorder %s120, %s134
      %p136 = scmp.eq.s32.totalorder %s21, 0
      %p137 = por %p135, %p136
      %s138 = ssub.s32 %s15, %s22
      %p139 = scmp.eq.s32.totalorder %s138, 0
      %s141 = sadd.s32 %s140, 1
      %s142 = scalar_select %p139, %s140, %s141
      %p145 = pneg %p139
      %p146 = scmp.eq.s32.totalorder %s15, 1
      %p147 = por %p145, %p146
      %p148 = scmp.ne.s32.totalorder %s140, %s143
      %p149 = scmp.eq.s32.totalorder %s15, 0
      %p150 = por %p148, %p149
      %p151 = scmp.ne.s32.totalorder %s140, %s143
      %p152 = scmp.eq.s32.totalorder %s20, 1
      %p153 = por %p151, %p152
      %p154 = scmp.ne.s32.totalorder %s143, %s144
      %p155 = scmp.eq.s32.totalorder %s20, 0
      %p156 = por %p154, %p155
      %p157 = scmp.ne.s32.totalorder %s143, %s144
      %p158 = scmp.eq.s32.totalorder %s21, 1
      %p159 = por %p157, %p158
      %p161 = scmp.ne.s32.totalorder %s144, %s160
      %p162 = scmp.eq.s32.totalorder %s21, 0
      %p163 = por %p161, %p162
      %s164 = ssub.s32 %s15, %s22
      %p165 = scmp.eq.s32.totalorder %s164, 0
      %s167 = sadd.s32 %s166, 1
      %s168 = scalar_select %p165, %s166, %s167
      %p171 = pneg %p165
      %p172 = scmp.eq.s32.totalorder %s15, 1
      %p173 = por %p171, %p172
      %p174 = scmp.ne.s32.totalorder %s166, %s169
      %p175 = scmp.eq.s32.totalorder %s15, 0
      %p176 = por %p174, %p175
      %p177 = scmp.ne.s32.totalorder %s166, %s169
      %p178 = scmp.eq.s32.totalorder %s20, 1
      %p179 = por %p177, %p178
      %p180 = scmp.ne.s32.totalorder %s169, %s170
      %p181 = scmp.eq.s32.totalorder %s20, 0
      %p182 = por %p180, %p181
      %p183 = scmp.ne.s32.totalorder %s169, %s170
      %p184 = scmp.eq.s32.totalorder %s21, 1
      %p185 = por %p183, %p184
      %p187 = scmp.ne.s32.totalorder %s170, %s186
      %p188 = scmp.eq.s32.totalorder %s21, 0
      %p189 = por %p187, %p188
      %s190 = ssub.s32 %s15, %s22
      %p191 = scmp.eq.s32.totalorder %s190, 0
      %s193 = sadd.s32 %s192, 1
      %s194 = scalar_select %p191, %s192, %s193
      %p197 = pneg %p191
      %p198 = scmp.eq.s32.totalorder %s15, 1
      %p199 = por %p197, %p198
      %p200 = scmp.ne.s32.totalorder %s192, %s195
      %p201 = scmp.eq.s32.totalorder %s15, 0
      %p202 = por %p200, %p201
      %p203 = scmp.ne.s32.totalorder %s192, %s195
      %p204 = scmp.eq.s32.totalorder %s20, 1
      %p205 = por %p203, %p204
      %p206 = scmp.ne.s32.totalorder %s195, %s196
      %p207 = scmp.eq.s32.totalorder %s20, 0
      %p208 = por %p206, %p207
      %p209 = scmp.ne.s32.totalorder %s195, %s196
      %p210 = scmp.eq.s32.totalorder %s21, 1
      %p211 = por %p209, %p210
      %p213 = scmp.ne.s32.totalorder %s196, %s212
      %p214 = scmp.eq.s32.totalorder %s21, 0
      %p215 = por %p213, %p214
      %p216 = scmp.le.s32.totalorder 1, %s15
      %p217 = scmp.lt.s32.totalorder %s15, 3
      %p218 = pnand %p216, %p217
      %p219 = pneg %p218
      // Predicated region
      $region9: #{edm_forward.1} parent=5 // pred_check
        _
      $region10: #{edm_forward.1} parent=5 // pred_check_branch
        %221 = sbr.rel (%p218) target = $region12
      $region11: #{edm_forward.1} parent=5 // pred_region
        %s222 = ssub.s32 %s15, 1
        // Predicated region
        $region13: #{edm_forward.1} parent=11 // pred_check
          %p223 = pneg %p36
        $region14: #{edm_forward.1} parent=11 // pred_check_branch
          %225 = sbr.rel (%p223) target = $region16
        $region15: #{edm_forward.1} parent=11 // pred_region
          %s227 = ssub.s32 32, 32
          %228 = vsyncadd [#allocation3], %s227
          %s230 = sshll.u32 %s0, 4
          %s231 = int_to_ptr.vmem [resolvable:$true] %s230
          %233 = dma.vmem_to_smem %s231, 32, [#allocation2], [#allocation3]
        $region16: #{edm_forward.1} parent=11 // pred_fallthru
          _
        // Predicated region
        $region17: #{edm_forward.1} parent=11 // pred_check
          %p234 = pneg %p109
        $region18: #{edm_forward.1} parent=11 // pred_check_branch
          %236 = sbr.rel (%p234) target = $region20
        $region19: #{edm_forward.1} parent=11 // pred_region
          _
        $region20: #{edm_forward.1} parent=11 // pred_fallthru
          _
        // Predicated region
        $region21: #{edm_forward.1} parent=11 // pred_check
          %p237 = pneg %p130
        $region22: #{edm_forward.1} parent=11 // pred_check_branch
          %239 = sbr.rel (%p237) target = $region24
        $region23: #{edm_forward.1} parent=11 // pred_region
          _
        $region24: #{edm_forward.1} parent=11 // pred_fallthru
          _
      $region12: #{edm_forward.1} parent=5 // pred_fallthru
        _
      %p240 = scmp.lt.s32.totalorder %s15, 2
      // Predicated region
      $region25: #{edm_forward.1} parent=5 // pred_check
        %p241 = pneg %p240
      $region26: #{edm_forward.1} parent=5 // pred_check_branch
        %243 = sbr.rel (%p241) target = $region28
      $region27: #{edm_forward.1} parent=5 // pred_region
        // Predicated region
        $region29: #{edm_forward.1} parent=27 // pred_check
          %p244 = pneg %p56
        $region30: #{edm_forward.1} parent=27 // pred_check_branch
          %246 = sbr.rel (%p244) target = $region32
        $region31: #{edm_forward.1} parent=27 // pred_region
          %p247 = scmp.lt.s32.totalorder %s15, 1
          %s248 = scalar_select %p247, %s15, 1
          %s249 = smul.addr %s248, 8
          %s250 = scalar_lea.vmem %s1, %s249
        $region32: #{edm_forward.1} parent=27 // pred_fallthru
          _
        // Predicated region
        $region33: #{edm_forward.1} parent=27 // pred_check
          %p251 = pneg %p82
        $region34: #{edm_forward.1} parent=27 // pred_check_branch
          %253 = sbr.rel (%p251) target = $region36
        $region35: #{edm_forward.1} parent=27 // pred_region
          %p254 = scmp.lt.s32.totalorder %s15, 1
          %s255 = scalar_select %p254, %s15, 1
          %s256 = smul.addr %s255, 8
          %s257 = scalar_lea.vmem %s2, %s256
        $region36: #{edm_forward.1} parent=27 // pred_fallthru
          _
        // Predicated region
        $region37: #{edm_forward.1} parent=27 // pred_check
          %p258 = pneg %p150
        $region38: #{edm_forward.1} parent=27 // pred_check_branch
          %260 = sbr.rel (%p258) target = $region40
        $region39: #{edm_forward.1} parent=27 // pred_region
          %p261 = scmp.lt.s32.totalorder %s15, 1
          %s262 = scalar_select %p261, %s15, 1
          %s263 = smul.addr %s262, 2
          %s264 = scalar_lea.vmem %s5, %s263
        $region40: #{edm_forward.1} parent=27 // pred_fallthru
          _
      $region28: #{edm_forward.1} parent=5 // pred_fallthru
        _
      %p265 = scmp.le.s32.totalorder 1, %s15
      %p266 = scmp.lt.s32.totalorder %s15, 3
      %p267 = pnand %p265, %p266
      %p268 = pneg %p267
      // Predicated region
      $region41: #{edm_forward.1} parent=5 // pred_check
        _
      $region42: #{edm_forward.1} parent=5 // pred_check_branch
        %270 = sbr.rel (%p267) target = $region44
      $region43: #{edm_forward.1} parent=5 // pred_region
        %s271 = ssub.s32 %s15, 1
        // Predicated region
        $region45: #{edm_forward.1} parent=43 // pred_check
          %p272 = pneg %p36
        $region46: #{edm_forward.1} parent=43 // pred_check_branch
          %274 = sbr.rel (%p272) target = $region48
        $region47: #{edm_forward.1} parent=43 // pred_region
          %275 = dma.done [#allocation3], 32
        $region48: #{edm_forward.1} parent=43 // pred_fallthru
          _
        %276 = sfence
        %p277 = pneg %p36
        %p278 = pneg %p33
        %p279 = scmp.lt.s32.totalorder %s20, 1
        %s280 = scalar_select %p279, %s20, 1
        %s281 = smul.addr %s280, 8
        %s282 = scalar_lea.vmem %s1, %s281
        %p283 = pneg %p62
        %p284 = pneg %p59
        %p285 = scmp.lt.s32.totalorder %s20, 1
        %s286 = scalar_select %p285, %s20, 1
        %s287 = smul.addr %s286, 8
        %s288 = scalar_lea.vmem %s2, %s287
        %p289 = pneg %p88
        %p290 = pneg %p85
        %p291 = pneg %p109
        %p292 = pneg %p106
        %p293 = pneg %p130
        %p294 = pneg %p127
        %p295 = scmp.lt.s32.totalorder %s20, 1
        %s296 = scalar_select %p295, %s20, 1
        %s297 = smul.addr %s296, 2
        %s298 = scalar_lea.vmem %s5, %s297
        %p299 = pneg %p156
        %p300 = pneg %p153
        %p301 = pneg %p182
        %p302 = pneg %p179
        %p303 = scmp.lt.s32.totalorder %s20, 1
        %s304 = scalar_select %p303, %s20, 1
        %s305 = smul.addr %s304, 8
        %s306 = scalar_lea.vmem %s6, %s305
        %p307 = pneg %p208
        %p308 = pneg %p205
        %p309 = scmp.lt.s32.totalorder %s20, 1
        %s310 = scalar_select %p309, %s20, 1
        %s311 = scalar_lea.vmem %s7, %s310
        %p312 = scmp.lt.s32.totalorder %s20, 1
        %s313 = scalar_select %p312, %s20, 1
        %s314 = smul.addr %s313, 8
        %s315 = scalar_lea.vmem %s1, %s314
        %p316 = scmp.lt.s32.totalorder %s20, 1
        %s317 = scalar_select %p316, %s20, 1
        %s318 = smul.addr %s317, 8
        %s319 = scalar_lea.vmem %s2, %s318
        %p320 = scmp.lt.s32.totalorder %s20, 1
        %s321 = scalar_select %p320, %s20, 1
        %s322 = smul.addr %s321, 2
        %s323 = scalar_lea.vmem %s5, %s322
        %p324 = scmp.lt.s32.totalorder %s20, 1
        %s325 = scalar_select %p324, %s20, 1
        %s326 = smul.addr %s325, 8
        %s327 = scalar_lea.vmem %s6, %s326
        %p328 = scmp.lt.s32.totalorder %s20, 1
        %s329 = scalar_select %p328, %s20, 1
        %s330 = scalar_lea.vmem %s7, %s329
        %s332 = smul.u32 %s20, 128
        %s333 = sld [smem:[#allocation2 + %s332]]
        %s334 = sadd.s32 %s332, 1
        %s335 = sld [smem:[#allocation2 + %s334]]
        %s336 = sadd.s32 %s332, 2
        %s337 = sld [smem:[#allocation2 + %s336]]
        %s338 = sadd.s32 %s332, 3
        %s339 = sld [smem:[#allocation2 + %s338]]
        %s340 = sadd.s32 %s332, 4
        %s341 = sld [smem:[#allocation2 + %s340]]
        %s342 = sadd.s32 %s332, 5
        %s343 = sld [smem:[#allocation2 + %s342]]
        %v344 = vld [vmem:[%s315] sm:$0xff]
        %v345 = vld [vmem:[%s319] sm:$0xff]
        %347 = vrot.lane.b32.xlu0 %v344, 127
        %v348 = vpop.permute.xlu0 %347
        %v350 = vsub.f32 %v344, %v348
        %352 = vset.pattern.permute.xlu0 8
        %353 = vperm.xlu0 %352, %v350
        %v354 = vpop.permute.xlu0 %353
        %v356 = vmul.f32 %v345, %v354
        %v357 = vstv %s333
        %v358 = vmul.f32 %v357, %v344
        %v359 = vstv %s335
        %v360 = vmul.f32 %v359, %v356
        %v361 = vadd.f32 %v358, %v360
        %362 = vset.pattern.permute.xlu0 9
        %363 = vperm.xlu0 %362, %v344
        %v364 = vpop.permute.xlu0 %363
        %v366 = vmul.f32 %v344, %v364
        %v367 = vmul.f32 %v361, %v354
        %v368 = vadd.f32 %v366, %v367
        %vm369 = vcmask 80896
        %370 = vst.msk [vmem:[%s327] sm:$0xff] %vm369, %v368
        %v371 = vld [vmem:[%s323] sm:$0x3]
        %v372 = vpack.c.bf16 %v368, %v368
        %v373 = vld [vmem:[%s3] sm:$0xf]
        %v374 = vld [vmem:[%s3 + $0x4] sm:$0x1]
        %v375 = vlaneseq
        %v376 = vshrl.u32 %v375, 7
        %v377 = vsub.s32 0, %v376
        %v378 = vrot.slane %v371, %v377
        %v381 = vunpack.c.l.b16 %v373
        %v382 = vunpack.c.l.b16 %v374
        %v383 = vpack.c.b16 %v382, %v381
        %v385 = vsel %vm369, %v372, 0
        %vm387 = vcmask 1044480
        %v389 = vsel %vm387, %v383, 0
        %391 = vmatprep.subr.bf16.mxu0 0
        %392 = vmatpush1.bf16.msra.mxu0 %v389
        %393 = vmatprep.subr.bf16.mxu0 0
        %394 = vmatpush1.bf16.msra.mxu0 0
        %395 = vmatprep.subr.bf16.mxu0 0
        %396 = vmatpush1.bf16.msra.mxu0 0
        %397 = vmatprep.subr.bf16.mxu0 0
        %398 = vmatpush1.bf16.msra.mxu0 0
        %399 = vmatprep.subr.bf16.mxu0 0
        %400 = vmatpush1.bf16.msra.mxu0 0
        %401 = vmatprep.subr.bf16.mxu0 0
        %402 = vmatpush1.bf16.msra.mxu0 0
        %403 = vmatprep.subr.bf16.mxu0 0
        %404 = vmatpush1.bf16.msra.mxu0 0
        %405 = vmatprep.subr.bf16.mxu0 0
        %406 = vmatpush1.bf16.msra.mxu0 0
        %407 = vmatprep.subr.bf16.mxu0 0
        %408 = vmatpush1.bf16.msra.mxu0 0
        %409 = vmatprep.subr.bf16.mxu0 0
        %410 = vmatpush1.bf16.msra.mxu0 0
        %411 = vmatprep.subr.bf16.mxu0 0
        %412 = vmatpush1.bf16.msra.mxu0 0
        %413 = vmatprep.subr.bf16.mxu0 0
        %414 = vmatpush1.bf16.msra.mxu0 0
        %415 = vmatprep.subr.bf16.mxu0 0
        %416 = vmatpush1.bf16.msra.mxu0 0
        %417 = vmatprep.subr.bf16.mxu0 0
        %418 = vmatpush1.bf16.msra.mxu0 0
        %419 = vmatprep.subr.bf16.mxu0 0
        %420 = vmatpush1.bf16.msra.mxu0 0
        %421 = vmatprep.subr.bf16.mxu0 0
        %422 = vmatpush1.bf16.msra.mxu0 0
        %423 = vmatprep.mubr.bf16.mxu0 0
        %424 = vmatmul.mubr.bf16.gmra.mrb[0].mxu0 %v385
        %v425 = vpop.f32.mrb[0].mxu0
        %v426 = vadd.f32 %v378, %v425
        %v427 = vpop.f32.mrb[0].mxu0
        %v428 = vpop.f32.mrb[0].mxu0
        %v429 = vpop.f32.mrb[0].mxu0
        %430 = vdwg.mxu0
        %v431 = vxor.u32 %v426, 2147483648
        %v432 = vmul.f32 %v431, 1.442695
        %v433 = vpow.pop %v432
        %v434 = vadd.f32 %v433, 1.0
        %v435 = vrcp.pop %v434
        %v436 = vmul.f32 1.0, %v435
        %v437 = vmul.f32 %v426, %v436
        %v438 = vpack.c.bf16 %v437, %v437
        %v439 = vld [vmem:[%s4] sm:$0xf]
        %v440 = vld [vmem:[%s4 + $0x4] sm:$0xf]
        %v441 = vld [vmem:[%s4 + $0x8] sm:$0xf]
        %v442 = vld [vmem:[%s4 + $0xc] sm:$0xf]
        %v443 = vld [vmem:[%s4 + $0x10] sm:$0xf]
        %v444 = vld [vmem:[%s4 + $0x14] sm:$0xf]
        %v445 = vld [vmem:[%s4 + $0x18] sm:$0xf]
        %v446 = vld [vmem:[%s4 + $0x1c] sm:$0xf]
        %v447 = vld [vmem:[%s4 + $0x20] sm:$0xf]
        %v448 = vld [vmem:[%s4 + $0x24] sm:$0xf]
        %v449 = vld [vmem:[%s4 + $0x28] sm:$0xf]
        %v450 = vld [vmem:[%s4 + $0x2c] sm:$0xf]
        %v451 = vld [vmem:[%s4 + $0x30] sm:$0xf]
        %v452 = vld [vmem:[%s4 + $0x34] sm:$0xf]
        %v453 = vld [vmem:[%s4 + $0x38] sm:$0xf]
        %v454 = vld [vmem:[%s4 + $0x3c] sm:$0xf]
        %v455 = vlaneseq
        %v456 = vshrl.u32 %v455, 7
        %v457 = vsub.s32 1, %v456
        %v458 = vrot.slane %v371, %v457
        %v475 = vunpack.c.l.b16 %v439
        %v476 = vunpack.c.l.b16 %v440
        %v477 = vunpack.c.l.b16 %v441
        %v478 = vunpack.c.l.b16 %v442
        %v479 = vunpack.c.l.b16 %v443
        %v480 = vunpack.c.l.b16 %v444
        %v481 = vunpack.c.l.b16 %v445
        %v482 = vunpack.c.l.b16 %v446
        %v483 = vunpack.c.l.b16 %v447
        %v484 = vunpack.c.l.b16 %v448
        %v485 = vunpack.c.l.b16 %v449
        %v486 = vunpack.c.l.b16 %v450
        %v487 = vunpack.c.l.b16 %v451
        %v488 = vunpack.c.l.b16 %v452
        %v489 = vunpack.c.l.b16 %v453
        %v490 = vunpack.c.l.b16 %v454
        %v491 = vpack.c.b16 %v476, %v475
        %v492 = vpack.c.b16 %v478, %v477
        %v493 = vpack.c.b16 %v480, %v479
        %v494 = vpack.c.b16 %v482, %v481
        %v495 = vpack.c.b16 %v484, %v483
        %v496 = vpack.c.b16 %v486, %v485
        %v497 = vpack.c.b16 %v488, %v487
        %v498 = vpack.c.b16 %v490, %v489
        %507 = vmatprep.subr.bf16.mxu0 0
        %508 = vmatpush1.bf16.msra.mxu0 %v491
        %509 = vmatprep.subr.bf16.mxu0 0
        %510 = vmatpush1.bf16.msra.mxu0 %v492
        %511 = vmatprep.subr.bf16.mxu0 0
        %512 = vmatpush1.bf16.msra.mxu0 %v493
        %513 = vmatprep.subr.bf16.mxu0 0
        %514 = vmatpush1.bf16.msra.mxu0 %v494
        %515 = vmatprep.subr.bf16.mxu0 0
        %516 = vmatpush1.bf16.msra.mxu0 %v495
        %517 = vmatprep.subr.bf16.mxu0 0
        %518 = vmatpush1.bf16.msra.mxu0 %v496
        %519 = vmatprep.subr.bf16.mxu0 0
        %520 = vmatpush1.bf16.msra.mxu0 %v497
        %521 = vmatprep.subr.bf16.mxu0 0
        %522 = vmatpush1.bf16.msra.mxu0 %v498
        %523 = vmatprep.subr.bf16.mxu0 0
        %524 = vmatpush1.bf16.msra.mxu0 0
        %525 = vmatprep.subr.bf16.mxu0 0
        %526 = vmatpush1.bf16.msra.mxu0 0
        %527 = vmatprep.subr.bf16.mxu0 0
        %528 = vmatpush1.bf16.msra.mxu0 0
        %529 = vmatprep.subr.bf16.mxu0 0
        %530 = vmatpush1.bf16.msra.mxu0 0
        %531 = vmatprep.subr.bf16.mxu0 0
        %532 = vmatpush1.bf16.msra.mxu0 0
        %533 = vmatprep.subr.bf16.mxu0 0
        %534 = vmatpush1.bf16.msra.mxu0 0
        %535 = vmatprep.subr.bf16.mxu0 0
        %536 = vmatpush1.bf16.msra.mxu0 0
        %537 = vmatprep.subr.bf16.mxu0 0
        %538 = vmatpush1.bf16.msra.mxu0 0
        %539 = vmatprep.mubr.bf16.mxu0 0
        %540 = vmatmul.mubr.bf16.gmra.mrb[0].mxu0 %v438
        %v541 = vpop.f32.mrb[0].mxu0
        %v542 = vadd.f32 %v458, %v541
        %v543 = vpop.f32.mrb[0].mxu0
        %v544 = vpop.f32.mrb[0].mxu0
        %v545 = vpop.f32.mrb[0].mxu0
        %546 = vdwg.mxu0
        %v547 = vmul.f32 %v542, %v354
        %v548 = vlaneseq
        %v549 = vand.u32 %v548, 127
        %vm550 = vcmp.lt.s32.totalorder %v549, 3
        %v551 = vsel %vm550, 1, 0
        %v552 = vcvt.s32.f32 %v551
        %vm553 = vcmp.lt.s32.totalorder %v549, 8
        %v554 = vsel %vm553, 1, 0
        %v555 = vcvt.s32.f32 %v554
        %v556 = vsub.f32 %v356, %v547
        %v557 = vmul.f32 %v556, %v556
        %v558 = vsel %vm369, %v557, 0.0
        %559 = vadd.xlane.f32.xlu0 %v558
        %v560 = vpop.xlane.xlu0 %559
        %v561 = vrot.slane %v560, 4
        %v562 = vadd.f32 %v560, %v561
        %v563 = vrot.slane %v562, 2
        %v564 = vadd.f32 %v562, %v563
        %v565 = vrot.slane %v564, 1
        %v566 = vadd.f32 %v564, %v565
        %s567 = vtos %v566
        %v568 = vstv %s567
        %v569 = vmul.f32 %v557, %v552
        %v570 = vsel %vm369, %v569, 0.0
        %571 = vadd.xlane.f32.xlu0 %v570
        %v572 = vpop.xlane.xlu0 %571
        %v573 = vrot.slane %v572, 4
        %v574 = vadd.f32 %v572, %v573
        %v575 = vrot.slane %v574, 2
        %v576 = vadd.f32 %v574, %v575
        %v577 = vrot.slane %v576, 1
        %v578 = vadd.f32 %v576, %v577
        %s579 = vtos %v578
        %580 = vrot.lane.b32.xlu0 %v350, 120
        %v581 = vpop.permute.xlu0 %580
        %vm583 = vcmask 7168
        %v584 = vsel %vm583, %v581, 0.0
        %585 = vadd.xlane.f32.xlu0 %v584
        %v586 = vpop.xlane.xlu0 %585
        %v587 = vrot.slane %v586, 4
        %v588 = vadd.f32 %v586, %v587
        %v589 = vrot.slane %v588, 2
        %v590 = vadd.f32 %v588, %v589
        %v591 = vrot.slane %v590, 1
        %v592 = vadd.f32 %v590, %v591
        %s593 = vtos %v592
        %v594 = vstv %s593
        %v595 = vmul.f32 %v547, %v547
        %v596 = vsel %vm369, %v595, 0.0
        %597 = vadd.xlane.f32.xlu0 %v596
        %v598 = vpop.xlane.xlu0 %597
        %v599 = vrot.slane %v598, 4
        %v600 = vadd.f32 %v598, %v599
        %v601 = vrot.slane %v600, 2
        %v602 = vadd.f32 %v600, %v601
        %v603 = vrot.slane %v602, 1
        %v604 = vadd.f32 %v602, %v603
        %s605 = vtos %v604
        %v606 = vmul.f32 %v344, %v344
        %v607 = vmul.f32 %v606, %v555
        %v608 = vsel %vm369, %v607, 0.0
        %609 = vadd.xlane.f32.xlu0 %v608
        %v610 = vpop.xlane.xlu0 %609
        %v611 = vrot.slane %v610, 4
        %v612 = vadd.f32 %v610, %v611
        %v613 = vrot.slane %v612, 2
        %v614 = vadd.f32 %v612, %v613
        %v615 = vrot.slane %v614, 1
        %v616 = vadd.f32 %v614, %v615
        %s617 = vtos %v616
        %v618 = vstv %s617
        %v619 = vmul.f32 %v594, 3.0
        %v620 = vadd.f32 %v619, 40.0
        %v621 = vstv %s339
        %v622 = vmul.f32 %v621, %v620
        %s623 = smul.f32 %s337, 0.5
        %v624 = vstv %s623
        %v625 = vmul.f32 %v624, %v618
        %v626 = vadd.f32 %v622, %v625
        %v627 = vstv %s341
        %v628 = vmul.f32 %v627, %v568
        %v629 = vmax.f32 %v594, 1.0
        %v630 = vmul.f32 %v629, 8.0
        %v631 = vrcp.pop %v630
        %v632 = vmul.f32 %v568, %v631
        %v633 = vstv %s343
        %v634 = vmul.f32 %v633, %v619
        %v635 = vmul.f32 %v619, -0.0
        %vm636 = vcmp.eq.s32.totalorder %v549, 0
        %v637 = vsel %vm636, %v568, 0.0
        %vm638 = vcmp.eq.s32.totalorder %v549, 1
        %v639 = vsel %vm638, %v594, 0.0
        %v640 = vadd.f32 %v637, %v639
        %vm641 = vcmp.eq.s32.totalorder %v549, 2
        %v642 = vstv %s605
        %v643 = vsel %vm641, %v642, 0.0
        %v644 = vadd.f32 %v640, %v643
        %vm645 = vcmp.eq.s32.totalorder %v549, 3
        %v646 = vsel %vm645, %v626, 0.0
        %v647 = vadd.f32 %v644, %v646
        %vm648 = vcmp.eq.s32.totalorder %v549, 4
        %v649 = vstv %s579
        %v650 = vsel %vm648, %v649, 0.0
        %v651 = vadd.f32 %v647, %v650
        %vm652 = vcmp.eq.s32.totalorder %v549, 5
        %v653 = vsel %vm652, %v628, 0.0
        %v654 = vadd.f32 %v651, %v653
        %vm655 = vcmp.eq.s32.totalorder %v549, 6
        %v656 = vsel %vm655, %v632, 0.0
        %v657 = vadd.f32 %v654, %v656
        %vm658 = vcmp.eq.s32.totalorder %v549, 7
        %v659 = vsel %vm658, %v634, 0.0
        %v660 = vadd.f32 %v657, %v659
        %vm661 = vcmp.eq.s32.totalorder %v549, 8
        %v662 = vsel %vm661, %v635, 0.0
        %v663 = vadd.f32 %v660, %v662
        %664 = vst [vmem:[%s330] sm:$0x1] %v663
        %p665 = scmp.lt.s32.totalorder %s20, 1
        %s666 = scalar_select %p665, %s20, 1
        %s667 = smul.addr %s666, 8
        %s668 = scalar_lea.vmem %s6, %s667
        %p669 = scmp.lt.s32.totalorder %s20, 1
        %s670 = scalar_select %p669, %s20, 1
        %s671 = scalar_lea.vmem %s7, %s670
        // Predicated region
        $region49: #{edm_forward.1} parent=43 // pred_check
          %p672 = pneg %p179
        $region50: #{edm_forward.1} parent=43 // pred_check_branch
          %674 = sbr.rel (%p672) target = $region52
        $region51: #{edm_forward.1} parent=43 // pred_region
          _
        $region52: #{edm_forward.1} parent=43 // pred_fallthru
          _
        // Predicated region
        $region53: #{edm_forward.1} parent=43 // pred_check
          %p675 = pneg %p205
        $region54: #{edm_forward.1} parent=43 // pred_check_branch
          %677 = sbr.rel (%p675) target = $region56
        $region55: #{edm_forward.1} parent=43 // pred_region
          _
        $region56: #{edm_forward.1} parent=43 // pred_fallthru
          _
      $region44: #{edm_forward.1} parent=5 // pred_fallthru
        _
      %p678 = scmp.le.s32.totalorder 2, %s15
      // Predicated region
      $region57: #{edm_forward.1} parent=5 // pred_check
        %p679 = pneg %p678
      $region58: #{edm_forward.1} parent=5 // pred_check_branch
        %681 = sbr.rel (%p679) target = $region60
      $region59: #{edm_forward.1} parent=5 // pred_region
        %s682 = ssub.s32 %s15, 2
        // Predicated region
        $region61: #{edm_forward.1} parent=59 // pred_check
          %p683 = pneg %p185
        $region62: #{edm_forward.1} parent=59 // pred_check_branch
          %685 = sbr.rel (%p683) target = $region64
        $region63: #{edm_forward.1} parent=59 // pred_region
          %p686 = scmp.lt.s32.totalorder %s21, 1
          %s687 = scalar_select %p686, %s21, 1
          %s688 = smul.addr %s687, 8
          %s689 = scalar_lea.vmem %s6, %s688
        $region64: #{edm_forward.1} parent=59 // pred_fallthru
          _
        // Predicated region
        $region65: #{edm_forward.1} parent=59 // pred_check
          %p690 = pneg %p211
        $region66: #{edm_forward.1} parent=59 // pred_check_branch
          %692 = sbr.rel (%p690) target = $region68
        $region67: #{edm_forward.1} parent=59 // pred_region
          %p693 = scmp.lt.s32.totalorder %s21, 1
          %s694 = scalar_select %p693, %s21, 1
          %s695 = scalar_lea.vmem %s7, %s694
        $region68: #{edm_forward.1} parent=59 // pred_fallthru
          _
      $region60: #{edm_forward.1} parent=5 // pred_fallthru
        _
    $region6: #{edm_forward.1} parent=1 // loop_footer
      %s19 = sadd.s32 1, %s15
    $region7: #{edm_forward.1} parent=1 // loop_footer_branch
      %14 = sbr.rel target = $region3
    $region8: #{edm_forward.1} parent=1 // loop_exit
      _
    %696 = vsyncpa [#allocation3], 1
    %s697 = scalar_lea.sflag [#allocation3], 1
    %698 = vsyncpa %s697, 1

</llo_original>
